<compile_context>
chip_gen: v6e
topology: v6e:2x2x1
jax: 0.10.0
libtpu: 0.0.40
codegen_flags: <defaults>
</compile_context>

<pallas_src>
import jax
import jax.numpy as jnp
from jax.experimental import pallas as pl
from jax.experimental.pallas import tpu as pltpu

LANE = 128  # lane-dense output padding


# ----------------------------- Fused Pallas kernel -----------------------------

def make_fused_gcn_kernel(tb, N, n_gcn, n_dnn):
    """Kernel computing the whole GCN_Model forward for one batch tile.

    Ref order (all inputs, then the single output):
      a_ref  (tb, N, N)        bf16
      x_ref  (tb, N, Fin)      bf16
      n_gcn x packed (fin+1, H)  bf16   -- rows [0:fin] = W^T, row fin = bias
      readout packed (H+1, Dh)   bf16
      n_dnn x packed (Dh+1, Dh)  bf16
      output  packed (2, Dh)     bf16   -- row 0 = w_out^T, row 1 = bias (bcast)
      o_ref  (tb, 1, LANE)     f32
    """
    f32, bf16 = jnp.float32, jnp.bfloat16

    def kernel(*refs):
        it = iter(refs)
        a_ref = next(it)
        x_ref = next(it)
        gcn_refs = [next(it) for _ in range(n_gcn)]
        ro_ref = next(it)
        dnn_refs = [next(it) for _ in range(n_dnn)]
        ow_ref = next(it)
        o_ref = next(it)

        a = a_ref[...]                                   # (tb, N, N)   bf16
        x = x_ref[...]                                   # (tb, N, Fin) bf16

        # ---- GCN stack: relu((A @ X) @ W + b); dropout = identity (inference) ----
        for wp_ref in gcn_refs:
            wp = wp_ref[...]                             # (fin+1, fout) bf16
            fin = wp.shape[0] - 1
            fout = wp.shape[1]
            w = wp[:fin, :]                              # (fin, fout) bf16
            bvec = wp[fin:fin + 1, :].astype(f32)        # (1, fout)
            if fout < fin:
                # Transform first: aggregation runs over fout < fin channels.
                xw = jnp.dot(x.reshape(tb * N, fin), w,
                             preferred_element_type=f32)
                xw = xw.reshape(tb, N, fout).astype(bf16)
                h = jnp.einsum("bnm,bmf->bnf", a, xw,
                               preferred_element_type=f32) + bvec
            else:
                ax = jnp.einsum("bnm,bmf->bnf", a, x,
                                preferred_element_type=f32)
                h = jnp.dot(ax.reshape(tb * N, fin).astype(bf16), w,
                            preferred_element_type=f32)
                h = h.reshape(tb, N, fout) + bvec
            x = jnp.maximum(h, 0.0).astype(bf16)

        # ---- Readout: sum over nodes -> relu -> linear ----
        wp = ro_ref[...]
        hin = wp.shape[0] - 1
        w_r = wp[:hin, :]
        b_r = wp[hin:hin + 1, :].astype(f32)
        s = jnp.maximum(jnp.sum(x.astype(f32), axis=1), 0.0)          # (tb, H)
        feat = jnp.dot(s.astype(bf16), w_r, preferred_element_type=f32) + b_r

        # ---- DNN head: relu(linear) per layer ----
        for wp_ref in dnn_refs:
            wp = wp_ref[...]
            din = wp.shape[0] - 1
            w = wp[:din, :]
            b = wp[din:din + 1, :].astype(f32)
            feat = jnp.maximum(
                jnp.dot(feat.astype(bf16), w, preferred_element_type=f32) + b,
                0.0)

        # ---- Output layer (1-wide): VPU multiply + lane reduce (no MXU pass) ----
        op = ow_ref[...]                                  # (2, Dh) bf16
        w_o = op[0:1, :].astype(f32)                      # (1, Dh)
        b_o = op[1:2, 0:1].astype(f32)                    # (1, 1)
        res = jnp.sum(feat * w_o, axis=-1, keepdims=True) + b_o       # (tb, 1)

        # Lane-dense store; wrapper slices [:, 0, :1].
        o_ref[...] = jnp.broadcast_to(res[:, None, :], o_ref.shape)

    return kernel


# ----------------------------- Wrapper -----------------------------

def gcn_model_forward(params, X, A, *, tb=None):
    """Full GCN_Model forward in one pallas_call. X: [B,N,Fin], A: [B,N,N] -> [B,1]."""
    B, N, Fin = X.shape
    if tb is None:
        # Keep tb a divisor of (padded) batch; for realistic sizes, budget tb
        # against per-generation VMEM (see TODO at top of file).
        tb = 8 if B % 8 == 0 else 1
    B_pad = int(pl.cdiv(B, tb)) * tb

    Ab = A.astype(jnp.bfloat16)
    Xb = X.astype(jnp.bfloat16)
    if B_pad != B:
        Ab = jnp.pad(Ab, ((0, B_pad - B), (0, 0), (0, 0)))
        Xb = jnp.pad(Xb, ((0, B_pad - B), (0, 0), (0, 0)))

    def pack(Wt, b):
        # bias appended as an extra weight row -> single lane-aligned buffer.
        return jnp.concatenate([Wt, b[None, :]], axis=0).astype(jnp.bfloat16)

    gcn_packed = [pack(Wt, b) for (Wt, b) in params["gcn"]]
    readout_packed = pack(*params["readout"])
    dnn_packed = [pack(Wt, b) for (Wt, b) in params["dnn"]]
    Wt_o, b_o = params["out"]                                # (Dh, 1), (1,)
    Dh = Wt_o.shape[0]
    out_packed = jnp.concatenate(
        [Wt_o.T, jnp.broadcast_to(b_o.reshape(1, 1), (1, Dh))], axis=0
    ).astype(jnp.bfloat16)                                   # (2, Dh)

    weight_arrays = gcn_packed + [readout_packed] + dnn_packed + [out_packed]
    inputs = [Ab, Xb] + weight_arrays

    n_gcn, n_dnn = len(gcn_packed), len(dnn_packed)
    kernel = make_fused_gcn_kernel(tb, N, n_gcn, n_dnn)

    # Weights: full-array block, constant index_map -> DMA'd once, stay resident.
    weight_specs = [pl.BlockSpec(w.shape, lambda i: (0, 0)) for w in weight_arrays]

    grid_spec = pltpu.PrefetchScalarGridSpec(
        num_scalar_prefetch=0,
        grid=(B_pad // tb,),
        in_specs=[
            pl.BlockSpec((tb, N, N), lambda i: (i, 0, 0)),     # A batch tile
            pl.BlockSpec((tb, N, Fin), lambda i: (i, 0, 0)),   # X batch tile
        ] + weight_specs,
        out_specs=pl.BlockSpec((tb, 1, LANE), lambda i: (i, 0, 0)),
    )

    out_padded = pl.pallas_call(
        kernel,
        out_shape=jax.ShapeDtypeStruct((B_pad, 1, LANE), jnp.float32),
        grid_spec=grid_spec,
        compiler_params=pltpu.CompilerParams(
            dimension_semantics=("parallel",),          # megacore sharding on v7x
            vmem_limit_bytes=48 * 1024 * 1024,          # <= v7x 64 MiB physical, headroom kept
        ),
    )(*inputs)

    return out_padded[:B, 0, :1]                        # (B, 1)


# ----------------------------- Model definition -----------------------------

def init_linear_t(key, in_dim, out_dim):
    """PyTorch nn.Linear-style uniform init, weight stored pre-transposed [in, out]."""
    kw, kb = jax.random.split(key)
    bound = 1.0 / jnp.sqrt(jnp.float32(in_dim))
    Wt = jax.random.uniform(kw, (in_dim, out_dim), jnp.float32, -bound, bound)
    b = jax.random.uniform(kb, (out_dim,), jnp.float32, -bound, bound)
    return Wt, b


def init_gcn_model(key, in_features, gcn_hidden_nodes, gcn_hidden_layers,
                   dnn_hidden_nodes, dnn_hidden_layers):
    params = {"gcn": [], "dnn": []}
    keys = jax.random.split(key, gcn_hidden_layers + dnn_hidden_layers + 2)
    k = 0
    params["gcn"].append(init_linear_t(keys[k], in_features, gcn_hidden_nodes)); k += 1
    for _ in range(gcn_hidden_layers - 1):
        params["gcn"].append(init_linear_t(keys[k], gcn_hidden_nodes, gcn_hidden_nodes)); k += 1
    params["readout"] = init_linear_t(keys[k], gcn_hidden_nodes, dnn_hidden_nodes); k += 1
    for _ in range(dnn_hidden_layers):
        params["dnn"].append(init_linear_t(keys[k], dnn_hidden_nodes, dnn_hidden_nodes)); k += 1
    params["out"] = init_linear_t(keys[k], dnn_hidden_nodes, 1)
    return params


# ----------------------------- Reference (mirrors kernel precision) -----------------------------

def ref_forward_mixed(params, X, A):
    """Pure-JAX reference mirroring the kernel's bf16 inputs / f32 accumulation."""
    f32, bf16 = jnp.float32, jnp.bfloat16
    a = A.astype(bf16)
    x = X.astype(bf16)
    for Wt, b in params["gcn"]:
        fin, fout = Wt.shape
        w = Wt.astype(bf16)
        bvec = b.astype(bf16).astype(f32)[None, :]
        if fout < fin:
            xw = jnp.einsum("bnf,fo->bno", x, w,
                            preferred_element_type=f32).astype(bf16)
            h = jnp.einsum("bnm,bmf->bnf", a, xw, preferred_element_type=f32) + bvec
        else:
            ax = jnp.einsum("bnm,bmf->bnf", a, x,
                            preferred_element_type=f32).astype(bf16)
            h = jnp.einsum("bnf,fo->bno", ax, w, preferred_element_type=f32) + bvec
        x = jnp.maximum(h, 0.0).astype(bf16)
    Wt_r, b_r = params["readout"]
    s = jnp.maximum(jnp.sum(x.astype(f32), axis=1), 0.0)
    feat = jnp.dot(s.astype(bf16), Wt_r.astype(bf16),
                   preferred_element_type=f32) + b_r.astype(bf16).astype(f32)[None, :]
    for Wt, b in params["dnn"]:
        feat = jnp.maximum(
            jnp.dot(feat.astype(bf16), Wt.astype(bf16), preferred_element_type=f32)
            + b.astype(bf16).astype(f32)[None, :], 0.0)
    Wt_o, b_o = params["out"]
    w_row = Wt_o.astype(bf16).astype(f32)[:, 0][None, :]            # (1, Dh)
    res = jnp.sum(feat * w_row, axis=-1, keepdims=True)
    return res + b_o.astype(bf16).astype(f32).reshape(1, 1)


# ----------------------------- Main -----------------------------

if __name__ == "__main__":
    # Small shapes consistent with the module's forward.
    B, N = 2, 8
    in_features = 4
    gcn_hidden_nodes = 32
    gcn_hidden_layers = 2
    dnn_hidden_nodes = 32
    dnn_hidden_layers = 2

    root = jax.random.PRNGKey(0)
    k_params, k_x, k_a = jax.random.split(root, 3)

    params = init_gcn_model(k_params, in_features, gcn_hidden_nodes,
                            gcn_hidden_layers, dnn_hidden_nodes, dnn_hidden_layers)

    X = jax.random.normal(k_x, (B, N, in_features), jnp.float32)
    # Symmetric adjacency with self-loops (values arbitrary but deterministic).
    A_raw = jax.random.uniform(k_a, (B, N, N), jnp.float32)
    A = (A_raw + jnp.swapaxes(A_raw, 1, 2)) * 0.5 + jnp.eye(N, dtype=jnp.float32)[None]

    out = gcn_model_forward(params, X, A)
    out = jax.block_until_ready(out)
    assert out.shape == (B, 1), out.shape

    ref = ref_forward_mixed(params, X, A)
    ref = jax.block_until_ready(ref)
    assert jnp.allclose(out, ref, atol=1e-3, rtol=1e-3), (out, ref)

    print("KERNEL_OK")
</pallas_src>

<mosaic_0001>
module attributes {stable_mosaic.version = 11 : i64} {
  func.func @kernel(%arg0: i32, %arg1: memref<1x8x8xbf16, #tpu.memory_space<vmem>>, %arg2: memref<1x8x4xbf16, #tpu.memory_space<vmem>>, %arg3: memref<5x32xbf16, #tpu.memory_space<vmem>>, %arg4: memref<33x32xbf16, #tpu.memory_space<vmem>>, %arg5: memref<33x32xbf16, #tpu.memory_space<vmem>>, %arg6: memref<33x32xbf16, #tpu.memory_space<vmem>>, %arg7: memref<33x32xbf16, #tpu.memory_space<vmem>>, %arg8: memref<2x32xbf16, #tpu.memory_space<vmem>>, %arg9: memref<1x1x128xf32, #tpu.memory_space<vmem>>) attributes {dimension_semantics = [#tpu.dimension_semantics<parallel>], iteration_bounds = array<i64: 2>, scalar_prefetch = 0 : i64, scratch_operands = 0 : i64, tpu.core_type = #tpu.core_type<tc>, window_params = [{transform_indices = @transform_0, window_bounds = array<i64: 1, 8, 8>}, {transform_indices = @transform_1, window_bounds = array<i64: 1, 8, 4>}, {pipeline_mode = #tpu.pipeline_mode<synchronous>, transform_indices = @transform_2, window_bounds = array<i64: 5, 32>}, {pipeline_mode = #tpu.pipeline_mode<synchronous>, transform_indices = @transform_3, window_bounds = array<i64: 33, 32>}, {pipeline_mode = #tpu.pipeline_mode<synchronous>, transform_indices = @transform_4, window_bounds = array<i64: 33, 32>}, {pipeline_mode = #tpu.pipeline_mode<synchronous>, transform_indices = @transform_5, window_bounds = array<i64: 33, 32>}, {pipeline_mode = #tpu.pipeline_mode<synchronous>, transform_indices = @transform_6, window_bounds = array<i64: 33, 32>}, {pipeline_mode = #tpu.pipeline_mode<synchronous>, transform_indices = @transform_7, window_bounds = array<i64: 2, 32>}, {transform_indices = @transform_8, window_bounds = array<i64: 1, 1, 128>}]} {
    %c0 = arith.constant 0 : index
    %c0_0 = arith.constant 0 : index
    %c0_1 = arith.constant 0 : index
    %0 = vector.load %arg1[%c0, %c0_0, %c0_1] : memref<1x8x8xbf16, #tpu.memory_space<vmem>>, vector<1x8x8xbf16>
    %c0_2 = arith.constant 0 : index
    %c0_3 = arith.constant 0 : index
    %c0_4 = arith.constant 0 : index
    %1 = vector.load %arg2[%c0_2, %c0_3, %c0_4] : memref<1x8x4xbf16, #tpu.memory_space<vmem>>, vector<1x8x4xbf16>
    %c0_5 = arith.constant 0 : index
    %c0_6 = arith.constant 0 : index
    %2 = vector.load %arg3[%c0_5, %c0_6] : memref<5x32xbf16, #tpu.memory_space<vmem>>, vector<5x32xbf16>
    %3 = vector.extract_strided_slice %2 {offsets = [0, 0], sizes = [4, 32], strides = [1, 1]} : vector<5x32xbf16> to vector<4x32xbf16>
    %4 = vector.extract_strided_slice %2 {offsets = [4, 0], sizes = [1, 32], strides = [1, 1]} : vector<5x32xbf16> to vector<1x32xbf16>
    %5 = arith.extf %4 : vector<1x32xbf16> to vector<1x32xf32>
    "tpu.trace_start"() <{level = 10 : i32, message = "bnm,bmf->bnf"}> : () -> ()
    %cst = arith.constant dense<0.000000e+00> : vector<1x8x4xf32>
    %6 = tpu.matmul %0, %1, %cst {dimension_numbers = #tpu.dot_dimension_numbers<[2], [1], [1], [2], [0, 0, 0, 1, 1, 2], [0], [0]>} : vector<1x8x8xbf16>, vector<1x8x4xbf16>, vector<1x8x4xf32> -> vector<1x8x4xf32>
    "tpu.trace_stop"() : () -> ()
    %7 = vector.shape_cast %6 : vector<1x8x4xf32> to vector<8x4xf32>
    %8 = arith.truncf %7 : vector<8x4xf32> to vector<8x4xbf16>
    %cst_7 = arith.constant dense<0.000000e+00> : vector<8x32xf32>
    %9 = tpu.matmul %8, %3, %cst_7 {dimension_numbers = #tpu.dot_dimension_numbers<[1], [0], [0], [1], [0, 0, 1, 1], [], []>} : vector<8x4xbf16>, vector<4x32xbf16>, vector<8x32xf32> -> vector<8x32xf32>
    %10 = vector.shape_cast %9 : vector<8x32xf32> to vector<1x8x32xf32>
    %11 = vector.shape_cast %5 : vector<1x32xf32> to vector<1x1x32xf32>
    %12 = vector.broadcast %11 : vector<1x1x32xf32> to vector<1x8x32xf32>
    %13 = arith.addf %10, %12 : vector<1x8x32xf32>
    %cst_8 = arith.constant 0.000000e+00 : f32
    %14 = vector.broadcast %cst_8 : f32 to vector<1x8x32xf32>
    %15 = arith.maximumf %13, %14 : vector<1x8x32xf32>
    %16 = arith.truncf %15 : vector<1x8x32xf32> to vector<1x8x32xbf16>
    %c0_9 = arith.constant 0 : index
    %c0_10 = arith.constant 0 : index
    %17 = vector.load %arg4[%c0_9, %c0_10] : memref<33x32xbf16, #tpu.memory_space<vmem>>, vector<33x32xbf16>
    %18 = vector.extract_strided_slice %17 {offsets = [0, 0], sizes = [32, 32], strides = [1, 1]} : vector<33x32xbf16> to vector<32x32xbf16>
    %19 = vector.extract_strided_slice %17 {offsets = [32, 0], sizes = [1, 32], strides = [1, 1]} : vector<33x32xbf16> to vector<1x32xbf16>
    %20 = arith.extf %19 : vector<1x32xbf16> to vector<1x32xf32>
    "tpu.trace_start"() <{level = 10 : i32, message = "bnm,bmf->bnf"}> : () -> ()
    %cst_11 = arith.constant dense<0.000000e+00> : vector<1x8x32xf32>
    %21 = tpu.matmul %0, %16, %cst_11 {dimension_numbers = #tpu.dot_dimension_numbers<[2], [1], [1], [2], [0, 0, 0, 1, 1, 2], [0], [0]>} : vector<1x8x8xbf16>, vector<1x8x32xbf16>, vector<1x8x32xf32> -> vector<1x8x32xf32>
    "tpu.trace_stop"() : () -> ()
    %22 = vector.shape_cast %21 : vector<1x8x32xf32> to vector<8x32xf32>
    %23 = arith.truncf %22 : vector<8x32xf32> to vector<8x32xbf16>
    %cst_12 = arith.constant dense<0.000000e+00> : vector<8x32xf32>
    %24 = tpu.matmul %23, %18, %cst_12 {dimension_numbers = #tpu.dot_dimension_numbers<[1], [0], [0], [1], [0, 0, 1, 1], [], []>} : vector<8x32xbf16>, vector<32x32xbf16>, vector<8x32xf32> -> vector<8x32xf32>
    %25 = vector.shape_cast %24 : vector<8x32xf32> to vector<1x8x32xf32>
    %26 = vector.shape_cast %20 : vector<1x32xf32> to vector<1x1x32xf32>
    %27 = vector.broadcast %26 : vector<1x1x32xf32> to vector<1x8x32xf32>
    %28 = arith.addf %25, %27 : vector<1x8x32xf32>
    %cst_13 = arith.constant 0.000000e+00 : f32
    %29 = vector.broadcast %cst_13 : f32 to vector<1x8x32xf32>
    %30 = arith.maximumf %28, %29 : vector<1x8x32xf32>
    %31 = arith.truncf %30 : vector<1x8x32xf32> to vector<1x8x32xbf16>
    %c0_14 = arith.constant 0 : index
    %c0_15 = arith.constant 0 : index
    %32 = vector.load %arg5[%c0_14, %c0_15] : memref<33x32xbf16, #tpu.memory_space<vmem>>, vector<33x32xbf16>
    %33 = vector.extract_strided_slice %32 {offsets = [0, 0], sizes = [32, 32], strides = [1, 1]} : vector<33x32xbf16> to vector<32x32xbf16>
    %34 = vector.extract_strided_slice %32 {offsets = [32, 0], sizes = [1, 32], strides = [1, 1]} : vector<33x32xbf16> to vector<1x32xbf16>
    %35 = arith.extf %34 : vector<1x32xbf16> to vector<1x32xf32>
    %36 = arith.extf %31 : vector<1x8x32xbf16> to vector<1x8x32xf32>
    %cst_16 = arith.constant dense<0.000000e+00> : vector<1x32xf32>
    %37 = vector.multi_reduction <add>, %36, %cst_16 [1] : vector<1x8x32xf32> to vector<1x32xf32>
    %cst_17 = arith.constant 0.000000e+00 : f32
    %38 = vector.broadcast %cst_17 : f32 to vector<1x32xf32>
    %39 = arith.maximumf %37, %38 : vector<1x32xf32>
    %40 = arith.truncf %39 : vector<1x32xf32> to vector<1x32xbf16>
    %cst_18 = arith.constant dense<0.000000e+00> : vector<1x32xf32>
    %41 = tpu.matmul %40, %33, %cst_18 {dimension_numbers = #tpu.dot_dimension_numbers<[1], [0], [0], [1], [0, 0, 1, 1], [], []>} : vector<1x32xbf16>, vector<32x32xbf16>, vector<1x32xf32> -> vector<1x32xf32>
    %42 = arith.addf %41, %35 : vector<1x32xf32>
    %c0_19 = arith.constant 0 : index
    %c0_20 = arith.constant 0 : index
    %43 = vector.load %arg6[%c0_19, %c0_20] : memref<33x32xbf16, #tpu.memory_space<vmem>>, vector<33x32xbf16>
    %44 = vector.extract_strided_slice %43 {offsets = [0, 0], sizes = [32, 32], strides = [1, 1]} : vector<33x32xbf16> to vector<32x32xbf16>
    %45 = vector.extract_strided_slice %43 {offsets = [32, 0], sizes = [1, 32], strides = [1, 1]} : vector<33x32xbf16> to vector<1x32xbf16>
    %46 = arith.extf %45 : vector<1x32xbf16> to vector<1x32xf32>
    %47 = arith.truncf %42 : vector<1x32xf32> to vector<1x32xbf16>
    %cst_21 = arith.constant dense<0.000000e+00> : vector<1x32xf32>
    %48 = tpu.matmul %47, %44, %cst_21 {dimension_numbers = #tpu.dot_dimension_numbers<[1], [0], [0], [1], [0, 0, 1, 1], [], []>} : vector<1x32xbf16>, vector<32x32xbf16>, vector<1x32xf32> -> vector<1x32xf32>
    %49 = arith.addf %48, %46 : vector<1x32xf32>
    %cst_22 = arith.constant 0.000000e+00 : f32
    %50 = vector.broadcast %cst_22 : f32 to vector<1x32xf32>
    %51 = arith.maximumf %49, %50 : vector<1x32xf32>
    %c0_23 = arith.constant 0 : index
    %c0_24 = arith.constant 0 : index
    %52 = vector.load %arg7[%c0_23, %c0_24] : memref<33x32xbf16, #tpu.memory_space<vmem>>, vector<33x32xbf16>
    %53 = vector.extract_strided_slice %52 {offsets = [0, 0], sizes = [32, 32], strides = [1, 1]} : vector<33x32xbf16> to vector<32x32xbf16>
    %54 = vector.extract_strided_slice %52 {offsets = [32, 0], sizes = [1, 32], strides = [1, 1]} : vector<33x32xbf16> to vector<1x32xbf16>
    %55 = arith.extf %54 : vector<1x32xbf16> to vector<1x32xf32>
    %56 = arith.truncf %51 : vector<1x32xf32> to vector<1x32xbf16>
    %cst_25 = arith.constant dense<0.000000e+00> : vector<1x32xf32>
    %57 = tpu.matmul %56, %53, %cst_25 {dimension_numbers = #tpu.dot_dimension_numbers<[1], [0], [0], [1], [0, 0, 1, 1], [], []>} : vector<1x32xbf16>, vector<32x32xbf16>, vector<1x32xf32> -> vector<1x32xf32>
    %58 = arith.addf %57, %55 : vector<1x32xf32>
    %cst_26 = arith.constant 0.000000e+00 : f32
    %59 = vector.broadcast %cst_26 : f32 to vector<1x32xf32>
    %60 = arith.maximumf %58, %59 : vector<1x32xf32>
    %c0_27 = arith.constant 0 : index
    %c0_28 = arith.constant 0 : index
    %61 = vector.load %arg8[%c0_27, %c0_28] : memref<2x32xbf16, #tpu.memory_space<vmem>>, vector<2x32xbf16>
    %62 = vector.extract_strided_slice %61 {offsets = [0, 0], sizes = [1, 32], strides = [1, 1]} : vector<2x32xbf16> to vector<1x32xbf16>
    %63 = arith.extf %62 : vector<1x32xbf16> to vector<1x32xf32>
    %64 = vector.extract_strided_slice %61 {offsets = [1, 0], sizes = [1, 1], strides = [1, 1]} : vector<2x32xbf16> to vector<1x1xbf16>
    %65 = arith.extf %64 : vector<1x1xbf16> to vector<1x1xf32>
    %66 = arith.mulf %60, %63 : vector<1x32xf32>
    %cst_29 = arith.constant dense<0.000000e+00> : vector<1xf32>
    %67 = vector.multi_reduction <add>, %66, %cst_29 [1] : vector<1x32xf32> to vector<1xf32>
    %68 = vector.shape_cast %67 : vector<1xf32> to vector<1x1xf32>
    %69 = arith.addf %68, %65 : vector<1x1xf32>
    %70 = vector.shape_cast %69 : vector<1x1xf32> to vector<1x1x1xf32>
    %71 = vector.shape_cast %70 : vector<1x1x1xf32> to vector<1x1x1xf32>
    %72 = vector.broadcast %71 : vector<1x1x1xf32> to vector<1x1x128xf32>
    %c0_30 = arith.constant 0 : index
    %c0_31 = arith.constant 0 : index
    %c0_32 = arith.constant 0 : index
    %73 = vector.load %arg9[%c0_30, %c0_31, %c0_32] : memref<1x1x128xf32, #tpu.memory_space<vmem>>, vector<1x1x128xf32>
    tpu.vector_store %arg9[%c0_30, %c0_31, %c0_32], %72 {strides = array<i32>} : memref<1x1x128xf32, #tpu.memory_space<vmem>>, vector<1x1x128xf32>,
    return
  }
  func.func @transform_0(%arg0: i32) -> (i32, i32, i32) {
    %c0_i32 = arith.constant 0 : i32
    %c0_i32_0 = arith.constant 0 : i32
    %c0_i32_1 = arith.constant 0 : i32
    return %arg0, %c0_i32, %c0_i32_0 : i32, i32, i32
  }
  func.func @transform_1(%arg0: i32) -> (i32, i32, i32) {
    %c0_i32 = arith.constant 0 : i32
    %c0_i32_0 = arith.constant 0 : i32
    %c0_i32_1 = arith.constant 0 : i32
    return %arg0, %c0_i32, %c0_i32_0 : i32, i32, i32
  }
  func.func @transform_2(%arg0: i32) -> (i32, i32) {
    %c0_i32 = arith.constant 0 : i32
    %c0_i32_0 = arith.constant 0 : i32
    %c0_i32_1 = arith.constant 0 : i32
    return %c0_i32, %c0_i32_0 : i32, i32
  }
  func.func @transform_3(%arg0: i32) -> (i32, i32) {
    %c0_i32 = arith.constant 0 : i32
    %c0_i32_0 = arith.constant 0 : i32
    %c0_i32_1 = arith.constant 0 : i32
    return %c0_i32, %c0_i32_0 : i32, i32
  }
  func.func @transform_4(%arg0: i32) -> (i32, i32) {
    %c0_i32 = arith.constant 0 : i32
    %c0_i32_0 = arith.constant 0 : i32
    %c0_i32_1 = arith.constant 0 : i32
    return %c0_i32, %c0_i32_0 : i32, i32
  }
  func.func @transform_5(%arg0: i32) -> (i32, i32) {
    %c0_i32 = arith.constant 0 : i32
    %c0_i32_0 = arith.constant 0 : i32
    %c0_i32_1 = arith.constant 0 : i32
    return %c0_i32, %c0_i32_0 : i32, i32
  }
  func.func @transform_6(%arg0: i32) -> (i32, i32) {
    %c0_i32 = arith.constant 0 : i32
    %c0_i32_0 = arith.constant 0 : i32
    %c0_i32_1 = arith.constant 0 : i32
    return %c0_i32, %c0_i32_0 : i32, i32
  }
  func.func @transform_7(%arg0: i32) -> (i32, i32) {
    %c0_i32 = arith.constant 0 : i32
    %c0_i32_0 = arith.constant 0 : i32
    %c0_i32_1 = arith.constant 0 : i32
    return %c0_i32, %c0_i32_0 : i32, i32
  }
  func.func @transform_8(%arg0: i32) -> (i32, i32, i32) {
    %c0_i32 = arith.constant 0 : i32
    %c0_i32_0 = arith.constant 0 : i32
    %c0_i32_1 = arith.constant 0 : i32
    return %arg0, %c0_i32, %c0_i32_0 : i32, i32, i32
  }
}

</mosaic_0001>

<llo_original>
// kernel: tpu_custom_call.1
$region0: #{tpu_custom_call.1}
  #allocation0 [shape = 'u32[]', space=smem, size = 0x4, offset = 0x4, fixed_abs, tag = 'smem constant byte address 0x4 - core index']
  #allocation1 [shape = 'u32[144,128]{1,0:T(1,128)}', space=vmem, size = 0x12000, scoped, tag = 'internal scratch']
  %s0 = inlined_call_operand.vmem [shape: bf16[2,8,8], index: 0, kind: input, shape index: {}]
  %s1 = inlined_call_operand.vmem [shape: bf16[2,8,4], index: 1, kind: input, shape index: {}]
  %s2 = inlined_call_operand.vmem [shape: bf16[5,32], index: 2, kind: input, shape index: {}]
  %s3 = inlined_call_operand.vmem [shape: bf16[33,32], index: 3, kind: input, shape index: {}]
  %s4 = inlined_call_operand.vmem [shape: bf16[33,32], index: 4, kind: input, shape index: {}]
  %s5 = inlined_call_operand.vmem [shape: bf16[33,32], index: 5, kind: input, shape index: {}]
  %s6 = inlined_call_operand.vmem [shape: bf16[33,32], index: 6, kind: input, shape index: {}]
  %s7 = inlined_call_operand.vmem [shape: bf16[2,32], index: 7, kind: input, shape index: {}]
  %s8 = inlined_call_operand.hbm [shape: f32[2,1,128], index: 8, kind: output, shape index: {}]
  %s9 = sld [smem:[#allocation0]]
  $region65: #{tpu_custom_call.1} parent=0
    _
  %s11 = ssub.s32 1, %s9
  %s12 = scalar_select 0, %s11, %s9
  $region1: #{tpu_custom_call.1} parent=0
    #allocation2 [shape = 'u8[1024]{0}', space=vmem, size = 0x400, scoped, tag = 'output window, operand 0']
    #allocation3 [shape = 's32[2]{0}', space=sflag, size = 0x8, scoped, tag = 'scoped memory for tpu_custom_call.1']
    %13 = vsyncpa [#allocation3], 0
    %s14 = scalar_lea.sflag [#allocation3], 1
    %15 = vsyncpa %s14, 0
    loop: start=0, step=1, limit=4
    $region2: #{tpu_custom_call.1} parent=1 // loop_pre_header
      _
    $region3: #{tpu_custom_call.1} parent=1 // loop_header
      %s17 = sphi 0, %s21
      %p18 = scmp.ge.s32.totalorder %s17, 4
      %s27 = sphi 0, %s29
      %s30 = sphi 0, %s27
      %s31 = sphi 0, %s30
      %s47 = sphi 0, %s31
      %s53 = sphi 0, %s55
      %s56 = sphi 0, %s53
      %s57 = sphi 0, %s56
      %s73 = sphi 0, %s57
      %s77 = sphi 0, %s77
      %s79 = sphi 0, %s77
      %s80 = sphi 0, %s79
      %s94 = sphi 0, %s80
      %s98 = sphi 0, %s98
      %s100 = sphi 0, %s98
      %s101 = sphi 0, %s100
      %s115 = sphi 0, %s101
      %s119 = sphi 0, %s119
      %s121 = sphi 0, %s119
      %s122 = sphi 0, %s121
      %s136 = sphi 0, %s122
      %s140 = sphi 0, %s140
      %s142 = sphi 0, %s140
      %s143 = sphi 0, %s142
      %s157 = sphi 0, %s143
      %s161 = sphi 0, %s161
      %s163 = sphi 0, %s161
      %s164 = sphi 0, %s163
      %s178 = sphi 0, %s164
      %s182 = sphi 0, %s182
      %s184 = sphi 0, %s182
      %s185 = sphi 0, %s184
      %s199 = sphi 0, %s185
      %s205 = sphi 0, %s207
      %s208 = sphi 0, %s205
      %s209 = sphi 0, %s208
      %s225 = sphi 0, %s209
    $region4: #{tpu_custom_call.1} parent=1 // loop_header_branch
      %20 = sbr.rel (%p18) target = $region8
    $region5: #{tpu_custom_call.1} parent=1 // loop_body
      %s22 = ssub.s32 %s17, 1
      %s23 = ssub.s32 %s17, 2
      %s24 = sadd.s32 %s17, 1
      %s25 = ssub.s32 %s17, %s24
      %p26 = scmp.eq.s32.totalorder %s25, 0
      %s28 = sadd.s32 %s27, 1
      %s29 = scalar_select %p26, %s27, %s28
      %p32 = pneg %p26
      %p33 = scmp.eq.s32.totalorder %s17, 1
      %p34 = por %p32, %p33
      %p35 = scmp.ne.s32.totalorder %s27, %s30
      %p36 = scmp.eq.s32.totalorder %s17, 0
      %p37 = por %p35, %p36
      %p38 = scmp.ne.s32.totalorder %s27, %s30
      %p39 = scmp.eq.s32.totalorder %s22, 1
      %p40 = por %p38, %p39
      %p41 = scmp.ne.s32.totalorder %s30, %s31
      %p42 = scmp.eq.s32.totalorder %s22, 0
      %p43 = por %p41, %p42
      %p44 = scmp.ne.s32.totalorder %s30, %s31
      %p45 = scmp.eq.s32.totalorder %s23, 1
      %p46 = por %p44, %p45
      %p48 = scmp.ne.s32.totalorder %s31, %s47
      %p49 = scmp.eq.s32.totalorder %s23, 0
      %p50 = por %p48, %p49
      %s51 = ssub.s32 %s17, %s24
      %p52 = scmp.eq.s32.totalorder %s51, 0
      %s54 = sadd.s32 %s53, 1
      %s55 = scalar_select %p52, %s53, %s54
      %p58 = pneg %p52
      %p59 = scmp.eq.s32.totalorder %s17, 1
      %p60 = por %p58, %p59
      %p61 = scmp.ne.s32.totalorder %s53, %s56
      %p62 = scmp.eq.s32.totalorder %s17, 0
      %p63 = por %p61, %p62
      %p64 = scmp.ne.s32.totalorder %s53, %s56
      %p65 = scmp.eq.s32.totalorder %s22, 1
      %p66 = por %p64, %p65
      %p67 = scmp.ne.s32.totalorder %s56, %s57
      %p68 = scmp.eq.s32.totalorder %s22, 0
      %p69 = por %p67, %p68
      %p70 = scmp.ne.s32.totalorder %s56, %s57
      %p71 = scmp.eq.s32.totalorder %s23, 1
      %p72 = por %p70, %p71
      %p74 = scmp.ne.s32.totalorder %s57, %s73
      %p75 = scmp.eq.s32.totalorder %s23, 0
      %p76 = por %p74, %p75
      %s78 = sadd.s32 %s77, 1
      %p81 = scmp.eq.s32.totalorder %s17, 1
      %p82 = scmp.ne.s32.totalorder %s77, %s79
      %p83 = scmp.eq.s32.totalorder %s17, 0
      %p84 = por %p82, %p83
      %p85 = scmp.ne.s32.totalorder %s77, %s79
      %p86 = scmp.eq.s32.totalorder %s22, 1
      %p87 = por %p85, %p86
      %p88 = scmp.ne.s32.totalorder %s79, %s80
      %p89 = scmp.eq.s32.totalorder %s22, 0
      %p90 = por %p88, %p89
      %p91 = scmp.ne.s32.totalorder %s79, %s80
      %p92 = scmp.eq.s32.totalorder %s23, 1
      %p93 = por %p91, %p92
      %p95 = scmp.ne.s32.totalorder %s80, %s94
      %p96 = scmp.eq.s32.totalorder %s23, 0
      %p97 = por %p95, %p96
      %s99 = sadd.s32 %s98, 1
      %p102 = scmp.eq.s32.totalorder %s17, 1
      %p103 = scmp.ne.s32.totalorder %s98, %s100
      %p104 = scmp.eq.s32.totalorder %s17, 0
      %p105 = por %p103, %p104
      %p106 = scmp.ne.s32.totalorder %s98, %s100
      %p107 = scmp.eq.s32.totalorder %s22, 1
      %p108 = por %p106, %p107
      %p109 = scmp.ne.s32.totalorder %s100, %s101
      %p110 = scmp.eq.s32.totalorder %s22, 0
      %p111 = por %p109, %p110
      %p112 = scmp.ne.s32.totalorder %s100, %s101
      %p113 = scmp.eq.s32.totalorder %s23, 1
      %p114 = por %p112, %p113
      %p116 = scmp.ne.s32.totalorder %s101, %s115
      %p117 = scmp.eq.s32.totalorder %s23, 0
      %p118 = por %p116, %p117
      %s120 = sadd.s32 %s119, 1
      %p123 = scmp.eq.s32.totalorder %s17, 1
      %p124 = scmp.ne.s32.totalorder %s119, %s121
      %p125 = scmp.eq.s32.totalorder %s17, 0
      %p126 = por %p124, %p125
      %p127 = scmp.ne.s32.totalorder %s119, %s121
      %p128 = scmp.eq.s32.totalorder %s22, 1
      %p129 = por %p127, %p128
      %p130 = scmp.ne.s32.totalorder %s121, %s122
      %p131 = scmp.eq.s32.totalorder %s22, 0
      %p132 = por %p130, %p131
      %p133 = scmp.ne.s32.totalorder %s121, %s122
      %p134 = scmp.eq.s32.totalorder %s23, 1
      %p135 = por %p133, %p134
      %p137 = scmp.ne.s32.totalorder %s122, %s136
      %p138 = scmp.eq.s32.totalorder %s23, 0
      %p139 = por %p137, %p138
      %s141 = sadd.s32 %s140, 1
      %p144 = scmp.eq.s32.totalorder %s17, 1
      %p145 = scmp.ne.s32.totalorder %s140, %s142
      %p146 = scmp.eq.s32.totalorder %s17, 0
      %p147 = por %p145, %p146
      %p148 = scmp.ne.s32.totalorder %s140, %s142
      %p149 = scmp.eq.s32.totalorder %s22, 1
      %p150 = por %p148, %p149
      %p151 = scmp.ne.s32.totalorder %s142, %s143
      %p152 = scmp.eq.s32.totalorder %s22, 0
      %p153 = por %p151, %p152
      %p154 = scmp.ne.s32.totalorder %s142, %s143
      %p155 = scmp.eq.s32.totalorder %s23, 1
      %p156 = por %p154, %p155
      %p158 = scmp.ne.s32.totalorder %s143, %s157
      %p159 = scmp.eq.s32.totalorder %s23, 0
      %p160 = por %p158, %p159
      %s162 = sadd.s32 %s161, 1
      %p165 = scmp.eq.s32.totalorder %s17, 1
      %p166 = scmp.ne.s32.totalorder %s161, %s163
      %p167 = scmp.eq.s32.totalorder %s17, 0
      %p168 = por %p166, %p167
      %p169 = scmp.ne.s32.totalorder %s161, %s163
      %p170 = scmp.eq.s32.totalorder %s22, 1
      %p171 = por %p169, %p170
      %p172 = scmp.ne.s32.totalorder %s163, %s164
      %p173 = scmp.eq.s32.totalorder %s22, 0
      %p174 = por %p172, %p173
      %p175 = scmp.ne.s32.totalorder %s163, %s164
      %p176 = scmp.eq.s32.totalorder %s23, 1
      %p177 = por %p175, %p176
      %p179 = scmp.ne.s32.totalorder %s164, %s178
      %p180 = scmp.eq.s32.totalorder %s23, 0
      %p181 = por %p179, %p180
      %s183 = sadd.s32 %s182, 1
      %p186 = scmp.eq.s32.totalorder %s17, 1
      %p187 = scmp.ne.s32.totalorder %s182, %s184
      %p188 = scmp.eq.s32.totalorder %s17, 0
      %p189 = por %p187, %p188
      %p190 = scmp.ne.s32.totalorder %s182, %s184
      %p191 = scmp.eq.s32.totalorder %s22, 1
      %p192 = por %p190, %p191
      %p193 = scmp.ne.s32.totalorder %s184, %s185
      %p194 = scmp.eq.s32.totalorder %s22, 0
      %p195 = por %p193, %p194
      %p196 = scmp.ne.s32.totalorder %s184, %s185
      %p197 = scmp.eq.s32.totalorder %s23, 1
      %p198 = por %p196, %p197
      %p200 = scmp.ne.s32.totalorder %s185, %s199
      %p201 = scmp.eq.s32.totalorder %s23, 0
      %p202 = por %p200, %p201
      %s203 = ssub.s32 %s17, %s24
      %p204 = scmp.eq.s32.totalorder %s203, 0
      %s206 = sadd.s32 %s205, 1
      %s207 = scalar_select %p204, %s205, %s206
      %p210 = pneg %p204
      %p211 = scmp.eq.s32.totalorder %s17, 1
      %p212 = por %p210, %p211
      %p213 = scmp.ne.s32.totalorder %s205, %s208
      %p214 = scmp.eq.s32.totalorder %s17, 0
      %p215 = por %p213, %p214
      %p216 = scmp.ne.s32.totalorder %s205, %s208
      %p217 = scmp.eq.s32.totalorder %s22, 1
      %p218 = por %p216, %p217
      %p219 = scmp.ne.s32.totalorder %s208, %s209
      %p220 = scmp.eq.s32.totalorder %s22, 0
      %p221 = por %p219, %p220
      %p222 = scmp.ne.s32.totalorder %s208, %s209
      %p223 = scmp.eq.s32.totalorder %s23, 1
      %p224 = por %p222, %p223
      %p226 = scmp.ne.s32.totalorder %s209, %s225
      %p227 = scmp.eq.s32.totalorder %s23, 0
      %p228 = por %p226, %p227
      %p229 = scmp.le.s32.totalorder 1, %s17
      %p230 = scmp.lt.s32.totalorder %s17, 3
      %p231 = pnand %p229, %p230
      %p232 = pneg %p231
      // Predicated region
      $region9: #{tpu_custom_call.1} parent=5 // pred_check
        _
      $region10: #{tpu_custom_call.1} parent=5 // pred_check_branch
        %234 = sbr.rel (%p231) target = $region12
      $region11: #{tpu_custom_call.1} parent=5 // pred_region
        %s235 = ssub.s32 %s17, 1
        // Predicated region
        $region13: #{tpu_custom_call.1} parent=11 // pred_check
          %p236 = pneg %p90
        $region14: #{tpu_custom_call.1} parent=11 // pred_check_branch
          %238 = sbr.rel (%p236) target = $region16
        $region15: #{tpu_custom_call.1} parent=11 // pred_region
          _
        $region16: #{tpu_custom_call.1} parent=11 // pred_fallthru
          _
        // Predicated region
        $region17: #{tpu_custom_call.1} parent=11 // pred_check
          %p239 = pneg %p111
        $region18: #{tpu_custom_call.1} parent=11 // pred_check_branch
          %241 = sbr.rel (%p239) target = $region20
        $region19: #{tpu_custom_call.1} parent=11 // pred_region
          _
        $region20: #{tpu_custom_call.1} parent=11 // pred_fallthru
          _
        // Predicated region
        $region21: #{tpu_custom_call.1} parent=11 // pred_check
          %p242 = pneg %p132
        $region22: #{tpu_custom_call.1} parent=11 // pred_check_branch
          %244 = sbr.rel (%p242) target = $region24
        $region23: #{tpu_custom_call.1} parent=11 // pred_region
          _
        $region24: #{tpu_custom_call.1} parent=11 // pred_fallthru
          _
        // Predicated region
        $region25: #{tpu_custom_call.1} parent=11 // pred_check
          %p245 = pneg %p153
        $region26: #{tpu_custom_call.1} parent=11 // pred_check_branch
          %247 = sbr.rel (%p245) target = $region28
        $region27: #{tpu_custom_call.1} parent=11 // pred_region
          _
        $region28: #{tpu_custom_call.1} parent=11 // pred_fallthru
          _
        // Predicated region
        $region29: #{tpu_custom_call.1} parent=11 // pred_check
          %p248 = pneg %p174
        $region30: #{tpu_custom_call.1} parent=11 // pred_check_branch
          %250 = sbr.rel (%p248) target = $region32
        $region31: #{tpu_custom_call.1} parent=11 // pred_region
          _
        $region32: #{tpu_custom_call.1} parent=11 // pred_fallthru
          _
        // Predicated region
        $region33: #{tpu_custom_call.1} parent=11 // pred_check
          %p251 = pneg %p195
        $region34: #{tpu_custom_call.1} parent=11 // pred_check_branch
          %253 = sbr.rel (%p251) target = $region36
        $region35: #{tpu_custom_call.1} parent=11 // pred_region
          _
        $region36: #{tpu_custom_call.1} parent=11 // pred_fallthru
          _
      $region12: #{tpu_custom_call.1} parent=5 // pred_fallthru
        _
      %p254 = scmp.lt.s32.totalorder %s17, 2
      // Predicated region
      $region37: #{tpu_custom_call.1} parent=5 // pred_check
        %p255 = pneg %p254
      $region38: #{tpu_custom_call.1} parent=5 // pred_check_branch
        %257 = sbr.rel (%p255) target = $region40
      $region39: #{tpu_custom_call.1} parent=5 // pred_region
        // Predicated region
        $region41: #{tpu_custom_call.1} parent=39 // pred_check
          %p258 = pneg %p37
        $region42: #{tpu_custom_call.1} parent=39 // pred_check_branch
          %260 = sbr.rel (%p258) target = $region44
        $region43: #{tpu_custom_call.1} parent=39 // pred_region
          %p261 = scmp.lt.s32.totalorder %s17, 1
          %s262 = scalar_select %p261, %s17, 1
          %s263 = smul.addr %s262, 4
          %s264 = scalar_lea.vmem %s0, %s263
        $region44: #{tpu_custom_call.1} parent=39 // pred_fallthru
          _
        // Predicated region
        $region45: #{tpu_custom_call.1} parent=39 // pred_check
          %p265 = pneg %p63
        $region46: #{tpu_custom_call.1} parent=39 // pred_check_branch
          %267 = sbr.rel (%p265) target = $region48
        $region47: #{tpu_custom_call.1} parent=39 // pred_region
          %p268 = scmp.lt.s32.totalorder %s17, 1
          %s269 = scalar_select %p268, %s17, 1
          %s270 = smul.addr %s269, 4
          %s271 = scalar_lea.vmem %s1, %s270
        $region48: #{tpu_custom_call.1} parent=39 // pred_fallthru
          _
      $region40: #{tpu_custom_call.1} parent=5 // pred_fallthru
        _
      %p272 = scmp.le.s32.totalorder 1, %s17
      %p273 = scmp.lt.s32.totalorder %s17, 3
      %p274 = pnand %p272, %p273
      %p275 = pneg %p274
      // Predicated region
      $region49: #{tpu_custom_call.1} parent=5 // pred_check
        _
      $region50: #{tpu_custom_call.1} parent=5 // pred_check_branch
        %277 = sbr.rel (%p274) target = $region52
      $region51: #{tpu_custom_call.1} parent=5 // pred_region
        %s278 = ssub.s32 %s17, 1
        %p279 = scmp.lt.s32.totalorder %s22, 1
        %s280 = scalar_select %p279, %s22, 1
        %s281 = smul.addr %s280, 4
        %s282 = scalar_lea.vmem %s0, %s281
        %p283 = pneg %p43
        %p284 = pneg %p40
        %p285 = scmp.lt.s32.totalorder %s22, 1
        %s286 = scalar_select %p285, %s22, 1
        %s287 = smul.addr %s286, 4
        %s288 = scalar_lea.vmem %s1, %s287
        %p289 = pneg %p69
        %p290 = pneg %p66
        %p291 = pneg %p90
        %p292 = pneg %p87
        %p293 = pneg %p111
        %p294 = pneg %p108
        %p295 = pneg %p132
        %p296 = pneg %p129
        %p297 = pneg %p153
        %p298 = pneg %p150
        %p299 = pneg %p174
        %p300 = pneg %p171
        %p301 = pneg %p195
        %p302 = pneg %p192
        %p303 = pneg %p221
        %p304 = pneg %p218
        %s305 = sand.u32 %s208, 1
        %s306 = scalar_lea.sflag [#allocation3], %s305
        %s307 = sand.u32 %s208, 1
        %s308 = scalar_lea.vmem [#allocation2], %s307
        %p309 = scmp.lt.s32.totalorder %s22, 1
        %s310 = scalar_select %p309, %s22, 1
        %s311 = smul.addr %s310, 4
        %s312 = scalar_lea.vmem %s0, %s311
        %p313 = scmp.lt.s32.totalorder %s22, 1
        %s314 = scalar_select %p313, %s22, 1
        %s315 = smul.addr %s314, 4
        %s316 = scalar_lea.vmem %s1, %s315
        %v318 = vld [vmem:[%s312] sm:$0xf]
        %v319 = vld [vmem:[%s316] sm:$0xf]
        %v320 = vld [vmem:[%s2] sm:$0x7]
        %v321 = vunpack.c.l.bf16 %v320
        %vm322 = vcmask 64512
        %v324 = vsel %vm322, %v318, 0
        %vm326 = vcmask 1043456
        %v328 = vsel %vm326, %v319, 0
        %330 = vmatprep.subr.bf16.mxu0 0
        %331 = vmatpush1.bf16.msra.mxu0 0
        %332 = vmatprep.subr.bf16.mxu0 0
        %333 = vmatpush1.bf16.msra.mxu0 0
        %334 = vmatprep.subr.bf16.mxu0 0
        %335 = vmatpush1.bf16.msra.mxu0 0
        %336 = vmatprep.subr.bf16.mxu0 0
        %337 = vmatpush1.bf16.msra.mxu0 0
        %338 = vmatprep.subr.bf16.mxu0 0
        %339 = vmatpush1.bf16.msra.mxu0 0
        %340 = vmatprep.subr.bf16.mxu0 0
        %341 = vmatpush1.bf16.msra.mxu0 0
        %342 = vmatprep.subr.bf16.mxu0 0
        %343 = vmatpush1.bf16.msra.mxu0 0
        %344 = vmatprep.subr.bf16.mxu0 0
        %345 = vmatpush1.bf16.msra.mxu0 %v328
        %346 = vmatprep.subr.bf16.mxu0 0
        %347 = vmatpush2.bf16.msra.mxu0 0
        %348 = vmatprep.subr.bf16.mxu0 0
        %349 = vmatpush2.bf16.msra.mxu0 0
        %350 = vmatprep.subr.bf16.mxu0 0
        %351 = vmatpush2.bf16.msra.mxu0 0
        %352 = vmatprep.subr.bf16.mxu0 0
        %353 = vmatpush2.bf16.msra.mxu0 0
        %354 = vmatprep.subr.bf16.mxu0 0
        %355 = vmatpush2.bf16.msra.mxu0 0
        %356 = vmatprep.subr.bf16.mxu0 0
        %357 = vmatpush2.bf16.msra.mxu0 0
        %358 = vmatprep.subr.bf16.mxu0 0
        %359 = vmatpush2.bf16.msra.mxu0 0
        %360 = vmatprep.subr.bf16.mxu0 0
        %361 = vmatpush2.bf16.msra.mxu0 0
        %362 = vmatprep.mubr.bf16.mxu0 0
        %363 = vmatmul.mubr.bf16.gmra.mxu0 %v324
        %v364 = vpop.f32.mrf.mxu0
        %v365 = vadd.f32 0.0, %v364
        %v366 = vpop.f32.mrf.mxu0
        %v367 = vpop.f32.mrf.mxu0
        %v368 = vpop.f32.mrf.mxu0
        %369 = vdwg.mxu0
        %v370 = vpack.c.bf16 %v365, %v365
        %vm371 = vcmask 31744
        %v373 = vsel %vm371, %v370, 0
        %vm375 = vcmask 1041408
        %v377 = vsel %vm375, %v320, 0
        %379 = vmatprep.subr.bf16.mxu0 0
        %380 = vmatpush1.bf16.msra.mxu0 0
        %381 = vmatprep.subr.bf16.mxu0 0
        %382 = vmatpush1.bf16.msra.mxu0 0
        %383 = vmatprep.subr.bf16.mxu0 0
        %384 = vmatpush1.bf16.msra.mxu0 0
        %385 = vmatprep.subr.bf16.mxu0 0
        %386 = vmatpush1.bf16.msra.mxu0 0
        %387 = vmatprep.subr.bf16.mxu0 0
        %388 = vmatpush1.bf16.msra.mxu0 0
        %389 = vmatprep.subr.bf16.mxu0 0
        %390 = vmatpush1.bf16.msra.mxu0 0
        %391 = vmatprep.subr.bf16.mxu0 0
        %392 = vmatpush1.bf16.msra.mxu0 0
        %393 = vmatprep.subr.bf16.mxu0 0
        %394 = vmatpush1.bf16.msra.mxu0 %v377
        %395 = vmatprep.subr.bf16.mxu0 0
        %396 = vmatpush2.bf16.msra.mxu0 0
        %397 = vmatprep.subr.bf16.mxu0 0
        %398 = vmatpush2.bf16.msra.mxu0 0
        %399 = vmatprep.subr.bf16.mxu0 0
        %400 = vmatpush2.bf16.msra.mxu0 0
        %401 = vmatprep.subr.bf16.mxu0 0
        %402 = vmatpush2.bf16.msra.mxu0 0
        %403 = vmatprep.subr.bf16.mxu0 0
        %404 = vmatpush2.bf16.msra.mxu0 0
        %405 = vmatprep.subr.bf16.mxu0 0
        %406 = vmatpush2.bf16.msra.mxu0 0
        %407 = vmatprep.subr.bf16.mxu0 0
        %408 = vmatpush2.bf16.msra.mxu0 0
        %409 = vmatprep.subr.bf16.mxu0 0
        %410 = vmatpush2.bf16.msra.mxu0 0
        %411 = vmatprep.mubr.bf16.mxu0 0
        %412 = vmatmul.mubr.bf16.gmra.mxu0 %v373
        %v413 = vpop.f32.mrf.mxu0
        %v414 = vadd.f32 0.0, %v413
        %v415 = vpop.f32.mrf.mxu0
        %v416 = vpop.f32.mrf.mxu0
        %v417 = vpop.f32.mrf.mxu0
        %418 = vdwg.mxu0
        %v419 = vlaneseq
        %v420 = vshrl.u32 %v419, 7
        %v421 = vsub.s32 4, %v420
        %v422 = vrot.slane %v321, %v421
        %v423 = vadd.f32 %v414, %v422
        %v424 = vmax.f32 %v423, 0.0
        %v425 = vpack.c.bf16 %v424, %v424
        %v426 = vld [vmem:[%s3] sm:$0xf]
        %v427 = vld [vmem:[%s3 + $0x4] sm:$0xf]
        %v428 = vld [vmem:[%s3 + $0x8] sm:$0xf]
        %v429 = vld [vmem:[%s3 + $0xc] sm:$0xf]
        %v430 = vld [vmem:[%s3 + $0x10] sm:$0x1]
        %v431 = vunpack.c.l.bf16 %v430
        %v433 = vsel %vm326, %v425, 0
        %435 = vmatprep.subr.bf16.mxu0 0
        %436 = vmatpush1.bf16.msra.mxu0 0
        %437 = vmatprep.subr.bf16.mxu0 0
        %438 = vmatpush1.bf16.msra.mxu0 0
        %439 = vmatprep.subr.bf16.mxu0 0
        %440 = vmatpush1.bf16.msra.mxu0 0
        %441 = vmatprep.subr.bf16.mxu0 0
        %442 = vmatpush1.bf16.msra.mxu0 0
        %443 = vmatprep.subr.bf16.mxu0 0
        %444 = vmatpush1.bf16.msra.mxu0 0
        %445 = vmatprep.subr.bf16.mxu0 0
        %446 = vmatpush1.bf16.msra.mxu0 0
        %447 = vmatprep.subr.bf16.mxu0 0
        %448 = vmatpush1.bf16.msra.mxu0 0
        %449 = vmatprep.subr.bf16.mxu0 0
        %450 = vmatpush1.bf16.msra.mxu0 %v433
        %451 = vmatprep.subr.bf16.mxu0 0
        %452 = vmatpush2.bf16.msra.mxu0 0
        %453 = vmatprep.subr.bf16.mxu0 0
        %454 = vmatpush2.bf16.msra.mxu0 0
        %455 = vmatprep.subr.bf16.mxu0 0
        %456 = vmatpush2.bf16.msra.mxu0 0
        %457 = vmatprep.subr.bf16.mxu0 0
        %458 = vmatpush2.bf16.msra.mxu0 0
        %459 = vmatprep.subr.bf16.mxu0 0
        %460 = vmatpush2.bf16.msra.mxu0 0
        %461 = vmatprep.subr.bf16.mxu0 0
        %462 = vmatpush2.bf16.msra.mxu0 0
        %463 = vmatprep.subr.bf16.mxu0 0
        %464 = vmatpush2.bf16.msra.mxu0 0
        %465 = vmatprep.subr.bf16.mxu0 0
        %466 = vmatpush2.bf16.msra.mxu0 0
        %467 = vmatprep.mubr.bf16.mxu0 0
        %468 = vmatmul.mubr.bf16.gmra.mxu0 %v324
        %v469 = vpop.f32.mrf.mxu0
        %v470 = vadd.f32 0.0, %v469
        %v471 = vpop.f32.mrf.mxu0
        %v472 = vpop.f32.mrf.mxu0
        %v473 = vpop.f32.mrf.mxu0
        %474 = vdwg.mxu0
        %v475 = vpack.c.bf16 %v470, %v470
        %v480 = vunpack.c.l.b16 %v426
        %v481 = vunpack.c.l.b16 %v427
        %v482 = vunpack.c.l.b16 %v428
        %v483 = vunpack.c.l.b16 %v429
        %v484 = vpack.c.b16 %v481, %v480
        %v485 = vpack.c.b16 %v483, %v482
        %vm488 = vcmask 261120
        %v490 = vsel %vm488, %v475, 0
        %492 = vmatprep.subr.bf16.mxu0 0
        %493 = vmatpush1.bf16.msra.mxu0 0
        %494 = vmatprep.subr.bf16.mxu0 0
        %495 = vmatpush1.bf16.msra.mxu0 0
        %496 = vmatprep.subr.bf16.mxu0 0
        %497 = vmatpush1.bf16.msra.mxu0 0
        %498 = vmatprep.subr.bf16.mxu0 0
        %499 = vmatpush1.bf16.msra.mxu0 0
        %500 = vmatprep.subr.bf16.mxu0 0
        %501 = vmatpush1.bf16.msra.mxu0 0
        %502 = vmatprep.subr.bf16.mxu0 0
        %503 = vmatpush1.bf16.msra.mxu0 0
        %504 = vmatprep.subr.bf16.mxu0 0
        %505 = vmatpush1.bf16.msra.mxu0 %v485
        %506 = vmatprep.subr.bf16.mxu0 0
        %507 = vmatpush1.bf16.msra.mxu0 %v484
        %508 = vmatprep.subr.bf16.mxu0 0
        %509 = vmatpush2.bf16.msra.mxu0 0
        %510 = vmatprep.subr.bf16.mxu0 0
        %511 = vmatpush2.bf16.msra.mxu0 0
        %512 = vmatprep.subr.bf16.mxu0 0
        %513 = vmatpush2.bf16.msra.mxu0 0
        %514 = vmatprep.subr.bf16.mxu0 0
        %515 = vmatpush2.bf16.msra.mxu0 0
        %516 = vmatprep.subr.bf16.mxu0 0
        %517 = vmatpush2.bf16.msra.mxu0 0
        %518 = vmatprep.subr.bf16.mxu0 0
        %519 = vmatpush2.bf16.msra.mxu0 0
        %520 = vmatprep.subr.bf16.mxu0 0
        %521 = vmatpush2.bf16.msra.mxu0 0
        %522 = vmatprep.subr.bf16.mxu0 0
        %523 = vmatpush2.bf16.msra.mxu0 0
        %524 = vmatprep.mubr.bf16.mxu0 0
        %525 = vmatmul.mubr.bf16.gmra.mxu0 %v490
        %v526 = vpop.f32.mrf.mxu0
        %v527 = vadd.f32 0.0, %v526
        %v528 = vpop.f32.mrf.mxu0
        %v529 = vpop.f32.mrf.mxu0
        %v530 = vpop.f32.mrf.mxu0
        %531 = vdwg.mxu0
        %v532 = vlaneseq
        %v533 = vshrl.u32 %v532, 7
        %v534 = vsub.s32 0, %v533
        %v535 = vrot.slane %v431, %v534
        %v536 = vadd.f32 %v527, %v535
        %v537 = vmax.f32 %v536, 0.0
        %v538 = vpack.c.bf16 %v537, %v537
        %v539 = vld [vmem:[%s4] sm:$0xf]
        %v540 = vld [vmem:[%s4 + $0x4] sm:$0xf]
        %v541 = vld [vmem:[%s4 + $0x8] sm:$0xf]
        %v542 = vld [vmem:[%s4 + $0xc] sm:$0xf]
        %v543 = vld [vmem:[%s4 + $0x10] sm:$0x1]
        %v544 = vunpack.c.l.bf16 %v543
        %v545 = vunpack.c.l.bf16 %v538
        %v546 = vsel %vm488, %v545, 0.0
        %v547 = vrot.slane %v546, 4
        %v548 = vadd.f32 %v546, %v547
        %v549 = vrot.slane %v548, 2
        %v550 = vadd.f32 %v548, %v549
        %v551 = vrot.slane %v550, 1
        %v552 = vadd.f32 %v550, %v551
        %v553 = vmax.f32 %v552, 0.0
        %v554 = vpack.c.bf16 %v553, %v553
        %v559 = vunpack.c.l.b16 %v539
        %v560 = vunpack.c.l.b16 %v540
        %v561 = vunpack.c.l.b16 %v541
        %v562 = vunpack.c.l.b16 %v542
        %v563 = vpack.c.b16 %v560, %v559
        %v564 = vpack.c.b16 %v562, %v561
        %v568 = vsel %vm488, %v554, 0
        %570 = vmatprep.subr.bf16.mxu0 0
        %571 = vmatpush1.bf16.msra.mxu0 0
        %572 = vmatprep.subr.bf16.mxu0 0
        %573 = vmatpush1.bf16.msra.mxu0 0
        %574 = vmatprep.subr.bf16.mxu0 0
        %575 = vmatpush1.bf16.msra.mxu0 0
        %576 = vmatprep.subr.bf16.mxu0 0
        %577 = vmatpush1.bf16.msra.mxu0 0
        %578 = vmatprep.subr.bf16.mxu0 0
        %579 = vmatpush1.bf16.msra.mxu0 0
        %580 = vmatprep.subr.bf16.mxu0 0
        %581 = vmatpush1.bf16.msra.mxu0 0
        %582 = vmatprep.subr.bf16.mxu0 0
        %583 = vmatpush1.bf16.msra.mxu0 %v564
        %584 = vmatprep.subr.bf16.mxu0 0
        %585 = vmatpush1.bf16.msra.mxu0 %v563
        %586 = vmatprep.subr.bf16.mxu0 0
        %587 = vmatpush2.bf16.msra.mxu0 0
        %588 = vmatprep.subr.bf16.mxu0 0
        %589 = vmatpush2.bf16.msra.mxu0 0
        %590 = vmatprep.subr.bf16.mxu0 0
        %591 = vmatpush2.bf16.msra.mxu0 0
        %592 = vmatprep.subr.bf16.mxu0 0
        %593 = vmatpush2.bf16.msra.mxu0 0
        %594 = vmatprep.subr.bf16.mxu0 0
        %595 = vmatpush2.bf16.msra.mxu0 0
        %596 = vmatprep.subr.bf16.mxu0 0
        %597 = vmatpush2.bf16.msra.mxu0 0
        %598 = vmatprep.subr.bf16.mxu0 0
        %599 = vmatpush2.bf16.msra.mxu0 0
        %600 = vmatprep.subr.bf16.mxu0 0
        %601 = vmatpush2.bf16.msra.mxu0 0
        %602 = vmatprep.mubr.bf16.mxu0 0
        %603 = vmatmul.mubr.bf16.gmra.mxu0 %v568
        %v604 = vpop.f32.mrf.mxu0
        %v605 = vadd.f32 %v544, %v604
        %v606 = vpop.f32.mrf.mxu0
        %v607 = vpop.f32.mrf.mxu0
        %v608 = vpop.f32.mrf.mxu0
        %609 = vdwg.mxu0
        %v610 = vld [vmem:[%s5] sm:$0xf]
        %v611 = vld [vmem:[%s5 + $0x4] sm:$0xf]
        %v612 = vld [vmem:[%s5 + $0x8] sm:$0xf]
        %v613 = vld [vmem:[%s5 + $0xc] sm:$0xf]
        %v614 = vld [vmem:[%s5 + $0x10] sm:$0x1]
        %v615 = vunpack.c.l.bf16 %v614
        %v616 = vpack.c.bf16 %v605, %v605
        %v621 = vunpack.c.l.b16 %v610
        %v622 = vunpack.c.l.b16 %v611
        %v623 = vunpack.c.l.b16 %v612
        %v624 = vunpack.c.l.b16 %v613
        %v625 = vpack.c.b16 %v622, %v621
        %v626 = vpack.c.b16 %v624, %v623
        %v630 = vsel %vm488, %v616, 0
        %632 = vmatprep.subr.bf16.mxu0 0
        %633 = vmatpush1.bf16.msra.mxu0 0
        %634 = vmatprep.subr.bf16.mxu0 0
        %635 = vmatpush1.bf16.msra.mxu0 0
        %636 = vmatprep.subr.bf16.mxu0 0
        %637 = vmatpush1.bf16.msra.mxu0 0
        %638 = vmatprep.subr.bf16.mxu0 0
        %639 = vmatpush1.bf16.msra.mxu0 0
        %640 = vmatprep.subr.bf16.mxu0 0
        %641 = vmatpush1.bf16.msra.mxu0 0
        %642 = vmatprep.subr.bf16.mxu0 0
        %643 = vmatpush1.bf16.msra.mxu0 0
        %644 = vmatprep.subr.bf16.mxu0 0
        %645 = vmatpush1.bf16.msra.mxu0 %v626
        %646 = vmatprep.subr.bf16.mxu0 0
        %647 = vmatpush1.bf16.msra.mxu0 %v625
        %648 = vmatprep.subr.bf16.mxu0 0
        %649 = vmatpush2.bf16.msra.mxu0 0
        %650 = vmatprep.subr.bf16.mxu0 0
        %651 = vmatpush2.bf16.msra.mxu0 0
        %652 = vmatprep.subr.bf16.mxu0 0
        %653 = vmatpush2.bf16.msra.mxu0 0
        %654 = vmatprep.subr.bf16.mxu0 0
        %655 = vmatpush2.bf16.msra.mxu0 0
        %656 = vmatprep.subr.bf16.mxu0 0
        %657 = vmatpush2.bf16.msra.mxu0 0
        %658 = vmatprep.subr.bf16.mxu0 0
        %659 = vmatpush2.bf16.msra.mxu0 0
        %660 = vmatprep.subr.bf16.mxu0 0
        %661 = vmatpush2.bf16.msra.mxu0 0
        %662 = vmatprep.subr.bf16.mxu0 0
        %663 = vmatpush2.bf16.msra.mxu0 0
        %664 = vmatprep.mubr.bf16.mxu0 0
        %665 = vmatmul.mubr.bf16.gmra.mxu0 %v630
        %v666 = vpop.f32.mrf.mxu0
        %v667 = vadd.f32 %v615, %v666
        %v668 = vpop.f32.mrf.mxu0
        %v669 = vpop.f32.mrf.mxu0
        %v670 = vpop.f32.mrf.mxu0
        %671 = vdwg.mxu0
        %v672 = vmax.f32 %v667, 0.0
        %v673 = vld [vmem:[%s6] sm:$0xf]
        %v674 = vld [vmem:[%s6 + $0x4] sm:$0xf]
        %v675 = vld [vmem:[%s6 + $0x8] sm:$0xf]
        %v676 = vld [vmem:[%s6 + $0xc] sm:$0xf]
        %v677 = vld [vmem:[%s6 + $0x10] sm:$0x1]
        %v678 = vunpack.c.l.bf16 %v677
        %v679 = vpack.c.bf16 %v672, %v672
        %v684 = vunpack.c.l.b16 %v673
        %v685 = vunpack.c.l.b16 %v674
        %v686 = vunpack.c.l.b16 %v675
        %v687 = vunpack.c.l.b16 %v676
        %v688 = vpack.c.b16 %v685, %v684
        %v689 = vpack.c.b16 %v687, %v686
        %v693 = vsel %vm488, %v679, 0
        %695 = vmatprep.subr.bf16.mxu0 0
        %696 = vmatpush1.bf16.msra.mxu0 0
        %697 = vmatprep.subr.bf16.mxu0 0
        %698 = vmatpush1.bf16.msra.mxu0 0
        %699 = vmatprep.subr.bf16.mxu0 0
        %700 = vmatpush1.bf16.msra.mxu0 0
        %701 = vmatprep.subr.bf16.mxu0 0
        %702 = vmatpush1.bf16.msra.mxu0 0
        %703 = vmatprep.subr.bf16.mxu0 0
        %704 = vmatpush1.bf16.msra.mxu0 0
        %705 = vmatprep.subr.bf16.mxu0 0
        %706 = vmatpush1.bf16.msra.mxu0 0
        %707 = vmatprep.subr.bf16.mxu0 0
        %708 = vmatpush1.bf16.msra.mxu0 %v689
        %709 = vmatprep.subr.bf16.mxu0 0
        %710 = vmatpush1.bf16.msra.mxu0 %v688
        %711 = vmatprep.subr.bf16.mxu0 0
        %712 = vmatpush2.bf16.msra.mxu0 0
        %713 = vmatprep.subr.bf16.mxu0 0
        %714 = vmatpush2.bf16.msra.mxu0 0
        %715 = vmatprep.subr.bf16.mxu0 0
        %716 = vmatpush2.bf16.msra.mxu0 0
        %717 = vmatprep.subr.bf16.mxu0 0
        %718 = vmatpush2.bf16.msra.mxu0 0
        %719 = vmatprep.subr.bf16.mxu0 0
        %720 = vmatpush2.bf16.msra.mxu0 0
        %721 = vmatprep.subr.bf16.mxu0 0
        %722 = vmatpush2.bf16.msra.mxu0 0
        %723 = vmatprep.subr.bf16.mxu0 0
        %724 = vmatpush2.bf16.msra.mxu0 0
        %725 = vmatprep.subr.bf16.mxu0 0
        %726 = vmatpush2.bf16.msra.mxu0 0
        %727 = vmatprep.mubr.bf16.mxu0 0
        %728 = vmatmul.mubr.bf16.gmra.mxu0 %v693
        %v729 = vpop.f32.mrf.mxu0
        %v730 = vadd.f32 %v678, %v729
        %v731 = vpop.f32.mrf.mxu0
        %v732 = vpop.f32.mrf.mxu0
        %v733 = vpop.f32.mrf.mxu0
        %734 = vdwg.mxu0
        %v735 = vmax.f32 %v730, 0.0
        %v736 = vld [vmem:[%s7] sm:$0x1]
        %v737 = vunpack.c.l.bf16 %v736
        %v738 = vmul.f32 %v735, %v737
        %vm739 = vcmask 253952
        %v740 = vsel %vm739, %v738, 0.0
        %741 = vadd.xlane.f32.xlu0 %v740
        %v742 = vpop.xlane.xlu0 %741
        %v744 = vlaneseq
        %v745 = vshrl.u32 %v744, 7
        %v746 = vsub.s32 1, %v745
        %v747 = vrot.slane %v737, %v746
        %v749 = vadd.f32 %v742, %v747
        %751 = vset.pattern.permute.xlu0 0
        %752 = vperm.xlu0 %751, %v749
        %v753 = vpop.permute.xlu0 %752
        %755 = vst [vmem:[%s308] sm:$0x1] %v753
        %s756 = sand.u32 %s208, 1
        %s757 = scalar_lea.sflag [#allocation3], %s756
        %s758 = sand.u32 %s208, 1
        %s759 = scalar_lea.vmem [#allocation2], %s758
        // Predicated region
        $region53: #{tpu_custom_call.1} parent=51 // pred_check
          %p760 = pneg %p218
        $region54: #{tpu_custom_call.1} parent=51 // pred_check_branch
          %762 = sbr.rel (%p760) target = $region56
        $region55: #{tpu_custom_call.1} parent=51 // pred_region
          %s764 = ssub.s32 16, 16
          %765 = vsyncadd %s757, %s764
          %s766 = smul.addr %s22, 16
          %s767 = scalar_lea.hbm %s8, %s766
          %s769 = sshll.u32 %s759, 4
          %s770 = int_to_ptr.vmem [resolvable:$true] %s769
          %772 = dma.vmem_to_hbm [thread:$0]  %s770, 16, %s767, %s757
        $region56: #{tpu_custom_call.1} parent=51 // pred_fallthru
          _
      $region52: #{tpu_custom_call.1} parent=5 // pred_fallthru
        _
      %p773 = scmp.le.s32.totalorder 2, %s17
      // Predicated region
      $region57: #{tpu_custom_call.1} parent=5 // pred_check
        %p774 = pneg %p773
      $region58: #{tpu_custom_call.1} parent=5 // pred_check_branch
        %776 = sbr.rel (%p774) target = $region60
      $region59: #{tpu_custom_call.1} parent=5 // pred_region
        %s777 = ssub.s32 %s17, 2
        // Predicated region
        $region61: #{tpu_custom_call.1} parent=59 // pred_check
          %p778 = pneg %p224
        $region62: #{tpu_custom_call.1} parent=59 // pred_check_branch
          %780 = sbr.rel (%p778) target = $region64
        $region63: #{tpu_custom_call.1} parent=59 // pred_region
          %s781 = sand.u32 %s209, 1
          %s782 = scalar_lea.sflag [#allocation3], %s781
          %s783 = sand.u32 %s209, 1
          %s784 = scalar_lea.vmem [#allocation2], %s783
          %785 = dma.done %s782, 16
        $region64: #{tpu_custom_call.1} parent=59 // pred_fallthru
          _
      $region60: #{tpu_custom_call.1} parent=5 // pred_fallthru
        _
    $region6: #{tpu_custom_call.1} parent=1 // loop_footer
      %s21 = sadd.s32 1, %s17
    $region7: #{tpu_custom_call.1} parent=1 // loop_footer_branch
      %16 = sbr.rel target = $region3
    $region8: #{tpu_custom_call.1} parent=1 // loop_exit
      _
    %786 = vsyncpa [#allocation3], 1
    %s787 = scalar_lea.sflag [#allocation3], 1
    %788 = vsyncpa %s787, 1

</llo_original>
